<compile_context>
chip_gen: v7x
topology: tpu7x:2x2x1
jax: 0.10.0
libtpu: 0.0.40
codegen_flags: <defaults>
</compile_context>

<pallas_src>
import functools
import math

import jax
import jax.numpy as jnp
from jax.experimental import pallas as pl
from jax.experimental.pallas import tpu as pltpu


REPRESENTATION_SIZE = 20  # from DummyModel.__init__


def _fused_linear_kernel(x_ref, w_ref, b_ref, o_ref):
    # Single fused linear on the pre-folded weights:
    #   (tile_b, d_in) @ (d_in, rep) + (1, rep)  ->  (tile_b, rep)
    acc = jnp.dot(x_ref[...], w_ref[...], preferred_element_type=jnp.float32)
    o_ref[...] = (acc + b_ref[...]).astype(o_ref.dtype)


def _round_up(v, m):
    return ((v + m - 1) // m) * m


def fold_params(w1, b1, w2, b2):
    """One-time algebraic fold (exact up to f32 rounding):
       (x @ W1 + b1) @ W2 + b2 == x @ (W1 @ W2) + (b1 @ W2 + b2).
    Call once at init; pass the result to dummy_model_forward."""
    rep = w2.shape[0]
    w = jnp.dot(w1, w2, preferred_element_type=jnp.float32)
    b = (jnp.dot(b1.reshape(1, rep), w2, preferred_element_type=jnp.float32)
         + b2.reshape(1, rep))
    return w, b


@functools.partial(jax.jit, static_argnames=("block_b",))
def dummy_model_forward(x, w, b, *, block_b=4096):
    """Fused two-layer MLP forward. x: (B, d_in) f32, w: (d_in, rep), b: (1, rep)."""
    batch, d_in = x.shape
    rep = w.shape[1]
    assert w.shape == (d_in, rep) and b.shape == (1, rep)

    if batch <= 8:
        # Tiny batch: a single full-array block (block == full dim satisfies
        # the (8,128) rule even when batch < 8).
        tile_b = batch
    else:
        # >= 2 tiles (so both v7x TensorCores get work), rows a multiple of 8,
        # capped at block_b. No jnp.pad of x: the grid uses cdiv and Pallas
        # masks the out-of-range rows of the last tile's store.
        tile_b = min(block_b, _round_up(pl.cdiv(batch, 2), 8))
    nb = pl.cdiv(batch, tile_b)

    # TODO(synk): if profiling shows exposed DMA at large tiles, add
    # pipeline_mode=pl.Buffered(3) on the streamed x input / output specs.
    return pl.pallas_call(
        _fused_linear_kernel,
        out_shape=jax.ShapeDtypeStruct((batch, rep), x.dtype),
        grid=(nb,),
        in_specs=[
            pl.BlockSpec((tile_b, d_in), lambda i: (i, 0)),   # streamed x tiles
            pl.BlockSpec((d_in, rep), lambda i: (0, 0)),      # resident folded W
            pl.BlockSpec((1, rep), lambda i: (0, 0)),         # resident folded b
        ],
        out_specs=pl.BlockSpec((tile_b, rep), lambda i: (i, 0)),  # un-padded store
        compiler_params=pltpu.CompilerParams(
            dimension_semantics=("parallel",),  # shard batch grid across TCs on v7x
        ),
    )(x, w, b)


def init_params(key, d_in, rep):
    """Deterministic init mimicking torch.nn.Linear default (uniform +-1/sqrt(fan_in))."""
    k1, k2, k3, k4 = jax.random.split(key, 4)
    bound1 = 1.0 / math.sqrt(d_in)
    bound2 = 1.0 / math.sqrt(rep)
    # Stored already transposed relative to PyTorch's (out, in) convention.
    w1 = jax.random.uniform(k1, (d_in, rep), jnp.float32, -bound1, bound1)
    b1 = jax.random.uniform(k2, (rep,), jnp.float32, -bound1, bound1)
    w2 = jax.random.uniform(k3, (rep, rep), jnp.float32, -bound2, bound2)
    b2 = jax.random.uniform(k4, (rep,), jnp.float32, -bound2, bound2)
    return w1, b1, w2, b2


if __name__ == "__main__":
    key = jax.random.PRNGKey(0)
    d_in = 32
    kx, kp, kb = jax.random.split(key, 3)

    w1, b1, w2, b2 = init_params(kp, d_in, REPRESENTATION_SIZE)

    # Fold once at init (hoisted out of the per-call forward).
    w, b = fold_params(w1, b1, w2, b2)
    w, b = jax.block_until_ready((w, b))

    # Small batch: single full-array block path.
    x = jax.random.normal(kx, (8, d_in), jnp.float32)
    out = jax.block_until_ready(dummy_model_forward(x, w, b))
    ref = (x @ w1 + b1) @ w2 + b2
    assert out.shape == (8, REPRESENTATION_SIZE)
    assert jnp.allclose(out, ref, atol=1e-5, rtol=1e-5)

    # Larger batch that is NOT a multiple of the tile: exercises the cdiv grid
    # with masked tail store and a >= 2-tile grid (both v7x TensorCores).
    x_big = jax.random.normal(kb, (1048, d_in), jnp.float32)
    out_big = jax.block_until_ready(dummy_model_forward(x_big, w, b))
    ref_big = (x_big @ w1 + b1) @ w2 + b2
    assert out_big.shape == (1048, REPRESENTATION_SIZE)
    # Slightly looser tolerance: the fold reassociates the f32 matmuls.
    assert jnp.allclose(out_big, ref_big, atol=1e-4, rtol=1e-4)

    print("KERNEL_OK")
</pallas_src>

<mosaic_0001>
module attributes {stable_mosaic.version = 11 : i64} {
  func.func @_fused_linear_kernel(%arg0: i32, %arg1: memref<8x32xf32, #tpu.memory_space<vmem>>, %arg2: memref<32x20xf32, #tpu.memory_space<vmem>>, %arg3: memref<1x20xf32, #tpu.memory_space<vmem>>, %arg4: memref<8x20xf32, #tpu.memory_space<vmem>>) attributes {dimension_semantics = [#tpu.dimension_semantics<parallel>], iteration_bounds = array<i64: 1>, scalar_prefetch = 0 : i64, scratch_operands = 0 : i64, tpu.core_type = #tpu.core_type<tc>, window_params = [{transform_indices = @transform_0, window_bounds = array<i64: 8, 32>}, {pipeline_mode = #tpu.pipeline_mode<synchronous>, transform_indices = @transform_1, window_bounds = array<i64: 32, 20>}, {pipeline_mode = #tpu.pipeline_mode<synchronous>, transform_indices = @transform_2, window_bounds = array<i64: 1, 20>}, {transform_indices = @transform_3, window_bounds = array<i64: 8, 20>}]} {
    %c0 = arith.constant 0 : index
    %c0_0 = arith.constant 0 : index
    %0 = vector.load %arg1[%c0, %c0_0] : memref<8x32xf32, #tpu.memory_space<vmem>>, vector<8x32xf32>
    %c0_1 = arith.constant 0 : index
    %c0_2 = arith.constant 0 : index
    %1 = vector.load %arg2[%c0_1, %c0_2] : memref<32x20xf32, #tpu.memory_space<vmem>>, vector<32x20xf32>
    %cst = arith.constant dense<0.000000e+00> : vector<8x20xf32>
    %2 = tpu.matmul %0, %1, %cst {dimension_numbers = #tpu.dot_dimension_numbers<[1], [0], [0], [1], [0, 0, 1, 1], [], []>} : vector<8x32xf32>, vector<32x20xf32>, vector<8x20xf32> -> vector<8x20xf32>
    %c0_3 = arith.constant 0 : index
    %c0_4 = arith.constant 0 : index
    %3 = vector.load %arg3[%c0_3, %c0_4] : memref<1x20xf32, #tpu.memory_space<vmem>>, vector<1x20xf32>
    %4 = vector.broadcast %3 : vector<1x20xf32> to vector<8x20xf32>
    %5 = arith.addf %2, %4 : vector<8x20xf32>
    %c0_5 = arith.constant 0 : index
    %c0_6 = arith.constant 0 : index
    %6 = vector.load %arg4[%c0_5, %c0_6] : memref<8x20xf32, #tpu.memory_space<vmem>>, vector<8x20xf32>
    tpu.vector_store %arg4[%c0_5, %c0_6], %5 {strides = array<i32>} : memref<8x20xf32, #tpu.memory_space<vmem>>, vector<8x20xf32>,
    return
  }
  func.func @transform_0(%arg0: i32) -> (i32, i32) {
    %c0_i32 = arith.constant 0 : i32
    %c0_i32_0 = arith.constant 0 : i32
    return %arg0, %c0_i32 : i32, i32
  }
  func.func @transform_1(%arg0: i32) -> (i32, i32) {
    %c0_i32 = arith.constant 0 : i32
    %c0_i32_0 = arith.constant 0 : i32
    %c0_i32_1 = arith.constant 0 : i32
    return %c0_i32, %c0_i32_0 : i32, i32
  }
  func.func @transform_2(%arg0: i32) -> (i32, i32) {
    %c0_i32 = arith.constant 0 : i32
    %c0_i32_0 = arith.constant 0 : i32
    %c0_i32_1 = arith.constant 0 : i32
    return %c0_i32, %c0_i32_0 : i32, i32
  }
  func.func @transform_3(%arg0: i32) -> (i32, i32) {
    %c0_i32 = arith.constant 0 : i32
    %c0_i32_0 = arith.constant 0 : i32
    return %arg0, %c0_i32 : i32, i32
  }
}

</mosaic_0001>

<llo_original>
// kernel: dummy_model_forward.1
$region0: #{dummy_model_forward.1}
  #allocation0 [shape = 'u32[]', space=smem, size = 0x4, offset = 0x4, fixed_abs, tag = 'smem constant byte address 0x4 - core index']
  #allocation1 [shape = 'u32[144,128]{1,0:T(1,128)}', space=vmem, size = 0x12000, scoped, tag = 'internal scratch']
  %s0 = inlined_call_operand.vmem [shape: f32[8,32], index: 0, kind: input, shape index: {}]
  %s1 = inlined_call_operand.vmem [shape: f32[32,20], index: 1, kind: input, shape index: {}]
  %s2 = inlined_call_operand.vmem [shape: f32[1,20], index: 2, kind: input, shape index: {}]
  %s3 = inlined_call_operand.hbm [shape: f32[8,20], index: 3, kind: output, shape index: {}]
  %s4 = sld [smem:[#allocation0]]
  $region22: #{dummy_model_forward.1} parent=0
    _
  %s6 = ssub.s32 1, %s4
  %s7 = scalar_select 0, %s6, %s4
  $region1: #{dummy_model_forward.1} parent=0
    #allocation2 [shape = 'u8[4096]{0}', space=vmem, size = 0x1000, scoped, tag = 'output window, operand 0, single buffered']
    #allocation3 [shape = 's32[1]{0}', space=sflag, size = 0x4, scoped, tag = 'scoped memory for dummy_model_forward.1']
    %8 = vsyncpa [#allocation3], 0
    // Predicated region
    $region2: #{dummy_model_forward.1} parent=1 // pred_check
      _
    $region3: #{dummy_model_forward.1} parent=1 // pred_check_branch
      %10 = sbr.rel (0) target = $region5
    $region4: #{dummy_model_forward.1} parent=1 // pred_region
      _
    $region5: #{dummy_model_forward.1} parent=1 // pred_fallthru
      _
    // Predicated region
    $region6: #{dummy_model_forward.1} parent=1 // pred_check
      _
    $region7: #{dummy_model_forward.1} parent=1 // pred_check_branch
      %12 = sbr.rel (0) target = $region9
    $region8: #{dummy_model_forward.1} parent=1 // pred_region
      _
    $region9: #{dummy_model_forward.1} parent=1 // pred_fallthru
      _
    // Predicated region
    $region10: #{dummy_model_forward.1} parent=1 // pred_check
      _
    $region11: #{dummy_model_forward.1} parent=1 // pred_check_branch
      %14 = sbr.rel (0) target = $region13
    $region12: #{dummy_model_forward.1} parent=1 // pred_region
      _
    $region13: #{dummy_model_forward.1} parent=1 // pred_fallthru
      _
    %v15 = vld [vmem:[%s0] sm:$0xff]
    %v16 = vld [vmem:[%s1] sm:$0xff]
    %v17 = vld [vmem:[%s1 + $0x8] sm:$0xff]
    %v18 = vld [vmem:[%s1 + $0x10] sm:$0xff]
    %v19 = vld [vmem:[%s1 + $0x18] sm:$0xff]
    %v20 = vld [vmem:[%s2] sm:$0x1]
    %v22 = vlaneseq
    %v23 = vshrl.u32 %v22, 7
    %v24 = vsub.s32 0, %v23
    %v25 = vrot.slane %v20, %v24
    %vm27 = vcmask 261120
    %v29 = vsel %vm27, %v15, 0
    %31 = vmatprep.subr.mxu0 0.0
    %32 = vmatpush1.msra.mxu0 %v16
    %33 = vmatprep.subr.mxu0 0.0
    %34 = vmatpush1.msra.mxu0 %v17
    %35 = vmatprep.subr.mxu0 0.0
    %36 = vmatpush1.msra.mxu0 %v18
    %37 = vmatprep.subr.mxu0 0.0
    %38 = vmatpush1.msra.mxu0 %v19
    %39 = vmatprep.subr.mxu0 0.0
    %40 = vmatpush1.msra.mxu0 0.0
    %41 = vmatprep.subr.mxu0 0.0
    %42 = vmatpush1.msra.mxu0 0.0
    %43 = vmatprep.subr.mxu0 0.0
    %44 = vmatpush1.msra.mxu0 0.0
    %45 = vmatprep.subr.mxu0 0.0
    %46 = vmatpush1.msra.mxu0 0.0
    %47 = vmatprep.subr.mxu0 0.0
    %48 = vmatpush1.msra.mxu0 0.0
    %49 = vmatprep.subr.mxu0 0.0
    %50 = vmatpush1.msra.mxu0 0.0
    %51 = vmatprep.subr.mxu0 0.0
    %52 = vmatpush1.msra.mxu0 0.0
    %53 = vmatprep.subr.mxu0 0.0
    %54 = vmatpush1.msra.mxu0 0.0
    %55 = vmatprep.subr.mxu0 0.0
    %56 = vmatpush1.msra.mxu0 0.0
    %57 = vmatprep.subr.mxu0 0.0
    %58 = vmatpush1.msra.mxu0 0.0
    %59 = vmatprep.subr.mxu0 0.0
    %60 = vmatpush1.msra.mxu0 0.0
    %61 = vmatprep.subr.mxu0 0.0
    %62 = vmatpush1.msra.mxu0 0.0
    %63 = vmatprep.subr.mxu0 0.0
    %64 = vmatpush1.msra.mxu0 0.0
    %65 = vmatprep.subr.mxu0 0.0
    %66 = vmatpush1.msra.mxu0 0.0
    %67 = vmatprep.subr.mxu0 0.0
    %68 = vmatpush1.msra.mxu0 0.0
    %69 = vmatprep.subr.mxu0 0.0
    %70 = vmatpush1.msra.mxu0 0.0
    %71 = vmatprep.subr.mxu0 0.0
    %72 = vmatpush1.msra.mxu0 0.0
    %73 = vmatprep.subr.mxu0 0.0
    %74 = vmatpush1.msra.mxu0 0.0
    %75 = vmatprep.subr.mxu0 0.0
    %76 = vmatpush1.msra.mxu0 0.0
    %77 = vmatprep.subr.mxu0 0.0
    %78 = vmatpush1.msra.mxu0 0.0
    %79 = vmatprep.subr.mxu0 0.0
    %80 = vmatpush1.msra.mxu0 0.0
    %81 = vmatprep.subr.mxu0 0.0
    %82 = vmatpush1.msra.mxu0 0.0
    %83 = vmatprep.subr.mxu0 0.0
    %84 = vmatpush1.msra.mxu0 0.0
    %85 = vmatprep.subr.mxu0 0.0
    %86 = vmatpush1.msra.mxu0 0.0
    %87 = vmatprep.subr.mxu0 0.0
    %88 = vmatpush1.msra.mxu0 0.0
    %89 = vmatprep.subr.mxu0 0.0
    %90 = vmatpush1.msra.mxu0 0.0
    %91 = vmatprep.subr.mxu0 0.0
    %92 = vmatpush1.msra.mxu0 0.0
    %93 = vmatprep.subr.mxu0 0.0
    %94 = vmatpush1.msra.mxu0 0.0
    %95 = vmatprep.mubr.f32.mxu0 0.0
    %96 = vmatmul.mubr.f32.gmra.mrb[0].mxu0 %v29
    %v97 = vpop.f32.mrb[0].mxu0
    %v98 = vadd.f32 %v25, %v97
    %v99 = vpop.f32.mrb[0].mxu0
    %100 = vdwg.mxu0
    %vm101 = vcmask 162816
    %102 = vst.msk [vmem:[#allocation2] sm:$0xff] %vm101, %v98
    // Predicated region
    $region14: #{dummy_model_forward.1} parent=1 // pred_check
      _
    $region15: #{dummy_model_forward.1} parent=1 // pred_check_branch
      %104 = sbr.rel (0) target = $region17
    $region16: #{dummy_model_forward.1} parent=1 // pred_region
      %s106 = ssub.s32 128, 128
      %107 = vsyncadd [#allocation3], %s106
      %s109 = sshll.u32 [#allocation2], 4
      %s110 = int_to_ptr.vmem [resolvable:$true] %s109
      %112 = dma.vmem_to_hbm [thread:$0]  %s110, 128, %s3, [#allocation3]
    $region17: #{dummy_model_forward.1} parent=1 // pred_fallthru
      _
    // Predicated region
    $region18: #{dummy_model_forward.1} parent=1 // pred_check
      _
    $region19: #{dummy_model_forward.1} parent=1 // pred_check_branch
      %114 = sbr.rel (0) target = $region21
    $region20: #{dummy_model_forward.1} parent=1 // pred_region
      %115 = dma.done [#allocation3], 128
    $region21: #{dummy_model_forward.1} parent=1 // pred_fallthru
      _
    %116 = vsyncpa [#allocation3], 1

</llo_original>
